<compile_context>
chip_gen: v7x
topology: tpu7x:2x2x1
jax: 0.10.0
libtpu: 0.0.40
codegen_flags: <defaults>
</compile_context>

<pallas_src>
import functools

import jax
import jax.numpy as jnp
from jax.experimental import pallas as pl
from jax.experimental.pallas import tpu as pltpu

_INV_SQRT2 = 0.7071067811865475


def _ffn_kernel(x_ref, gamma_ref, beta_ref, w1_ref, b1_ref, w2_ref, b2_ref,
                o_ref, xn_ref, acc_ref, *, eps, approximate_gelu):
    hb = pl.program_id(1)

    # ---- LayerNorm once per row tile (one-pass stats, f32), init accumulator ----
    @pl.when(hb == 0)
    def _():
        x = x_ref[...].astype(jnp.float32)                       # (TM, dim)
        inv_dim = 1.0 / x.shape[-1]
        mean = jnp.sum(x, axis=-1, keepdims=True) * inv_dim
        msq = jnp.sum(x * x, axis=-1, keepdims=True) * inv_dim
        var = jnp.maximum(msq - mean * mean, 0.0)                 # biased, like PyTorch
        inv = jax.lax.rsqrt(var + eps)
        xn = (x - mean) * inv * gamma_ref[...].astype(jnp.float32) \
            + beta_ref[...].astype(jnp.float32)
        xn_ref[...] = xn.astype(xn_ref.dtype)                     # bf16 if weights are bf16
        acc_ref[...] = jnp.zeros_like(acc_ref)

    # ---- Streamed hidden block: Linear(dim -> TK_H), GELU, Linear(TK_H -> dim) ----
    h = jnp.dot(xn_ref[...], w1_ref[...], preferred_element_type=jnp.float32)
    h = h + b1_ref[...].astype(jnp.float32)

    if approximate_gelu:
        h = jax.nn.gelu(h, approximate=True)                      # tanh -> EUP slot
    else:
        # exact GELU (PyTorch nn.GELU default): 0.5*x*(1+erf(x/sqrt(2)))
        h = 0.5 * h * (1.0 + jax.lax.erf(h * _INV_SQRT2))

    # Dropout(p=0.0) is identity. Accumulate the partial second matmul in f32.
    acc_ref[...] += jnp.dot(h.astype(w2_ref.dtype), w2_ref[...],
                            preferred_element_type=jnp.float32)

    # ---- Finalize: bias + store at the last hidden block ----
    @pl.when(hb == pl.num_programs(1) - 1)
    def _():
        o_ref[...] = (acc_ref[...] + b2_ref[...].astype(jnp.float32)).astype(o_ref.dtype)


def _vmem_budget_bytes(tm, dim, tkh, x_bytes, w_bytes, out_bytes):
    """Per-step VMEM estimate (2x-buffered tiles + scratch + live intermediates)."""
    f32 = 4
    io = 2 * tm * dim * (x_bytes + out_bytes)                 # x tile + out tile, 2x buffered
    wts = 2 * (2 * dim * tkh * w_bytes + tkh * f32)           # W1/W2 blocks + b1, 2x buffered
    vecs = 2 * 3 * dim * f32                                  # gamma, beta, b2 (2x buffered)
    scratch = tm * dim * (w_bytes + f32)                      # xn + f32 accumulator
    live = 3 * tm * tkh * f32                                 # h block, GELU temps, bf16 copy
    need = int(1.3 * (io + wts + vecs + scratch + live))
    try:
        cap = pltpu.get_tpu_info().vmem_capacity_bytes         # 64 MiB v7x, 128 MiB v5e/v6e
    except Exception:
        cap = 64 * 1024 * 1024
    hi = max(32 * 1024 * 1024, cap - 8 * 1024 * 1024)          # leave compiler headroom
    return min(max(need, 32 * 1024 * 1024), hi)


def feed_forward(x, gamma, beta, w1, b1, w2, b2, *, eps=1e-5,
                 block_rows=256, block_hidden=2048,
                 approximate_gelu=False, out_dtype=None):
    """x: (B, S, dim) -> (B, S, dim).  Weights consumed in their given dtype."""
    B, S, dim = x.shape
    hidden = w1.shape[1]
    out_dtype = x.dtype if out_dtype is None else out_dtype
    N = B * S
    x2d = x.reshape(N, dim)

    # Row tile: multiple of 8 (128/256 for real shapes); pad N so every grid
    # step is a full tile (LN/GELU then run on deterministic zero padding).
    tm = block_rows if N >= block_rows else max(8, ((N + 7) // 8) * 8)
    n_pad = (-N) % tm
    if n_pad:
        x2d = jnp.pad(x2d, ((0, n_pad), (0, 0)))
    n_padded = N + n_pad

    # Hidden block: stream the hidden dim when it is large and divisible.
    if hidden <= block_hidden or hidden % block_hidden != 0:
        tkh = hidden
    else:
        tkh = block_hidden

    grid = (n_padded // tm, hidden // tkh)

    x_bytes = jnp.dtype(x.dtype).itemsize
    w_bytes = jnp.dtype(w1.dtype).itemsize
    out_bytes = jnp.dtype(out_dtype).itemsize

    # NOTE: gamma/beta/b2 use constant index_maps and are tiny; with hidden
    # streaming the weights are no longer resident, so pl.Buffered(1) on the
    # constants would save only a few KiB and is omitted for simplicity.
    out = pl.pallas_call(
        functools.partial(_ffn_kernel, eps=eps, approximate_gelu=approximate_gelu),
        out_shape=jax.ShapeDtypeStruct((n_padded, dim), out_dtype),
        grid_spec=pltpu.PrefetchScalarGridSpec(
            num_scalar_prefetch=0,
            grid=grid,
            in_specs=[
                pl.BlockSpec((tm, dim), lambda i, hb: (i, 0)),       # x (row tile)
                pl.BlockSpec((1, dim), lambda i, hb: (0, 0)),        # gamma
                pl.BlockSpec((1, dim), lambda i, hb: (0, 0)),        # beta
                pl.BlockSpec((dim, tkh), lambda i, hb: (0, hb)),     # W1 block (streamed)
                pl.BlockSpec((1, tkh), lambda i, hb: (0, hb)),       # b1 block (streamed)
                pl.BlockSpec((tkh, dim), lambda i, hb: (hb, 0)),     # W2 block (streamed)
                pl.BlockSpec((1, dim), lambda i, hb: (0, 0)),        # b2
            ],
            out_specs=pl.BlockSpec((tm, dim), lambda i, hb: (i, 0)),
            scratch_shapes=[
                pltpu.VMEM((tm, dim), w1.dtype),                     # xn (LayerNorm output)
                pltpu.VMEM((tm, dim), jnp.float32),                  # f32 accumulator
            ],
        ),
        compiler_params=pltpu.CompilerParams(
            dimension_semantics=("parallel", "arbitrary"),
            vmem_limit_bytes=_vmem_budget_bytes(tm, dim, tkh, x_bytes, w_bytes, out_bytes),
        ),
    )(x2d, gamma, beta, w1, b1, w2, b2)

    if n_pad:
        out = out[:N]
    return out.reshape(B, S, dim)


def _reference(x, gamma, beta, w1, b1, w2, b2, eps=1e-5):
    mean = jnp.mean(x, axis=-1, keepdims=True)
    var = jnp.mean((x - mean) ** 2, axis=-1, keepdims=True)
    xn = (x - mean) * jax.lax.rsqrt(var + eps) * gamma[0] + beta[0]
    h = jax.nn.gelu(xn @ w1 + b1[0], approximate=False)
    return h @ w2 + b2[0]


if __name__ == "__main__":
    B, S, dim, hidden = 2, 8, 32, 64

    key = jax.random.PRNGKey(0)
    kx, kg, kb, kw1, kb1, kw2, kb2 = jax.random.split(key, 7)

    x = jax.random.normal(kx, (B, S, dim), dtype=jnp.float32)
    gamma = jax.random.normal(kg, (1, dim), dtype=jnp.float32) * 0.1 + 1.0
    beta = jax.random.normal(kb, (1, dim), dtype=jnp.float32) * 0.1
    w1 = jax.random.normal(kw1, (dim, hidden), dtype=jnp.float32) * 0.05
    b1 = jax.random.normal(kb1, (1, hidden), dtype=jnp.float32) * 0.05
    w2 = jax.random.normal(kw2, (hidden, dim), dtype=jnp.float32) * 0.05
    b2 = jax.random.normal(kb2, (1, dim), dtype=jnp.float32) * 0.05

    # Pre-cast weights to bf16 ONCE (outside the kernel call / any jit), so no
    # per-call XLA convert is emitted; the kernel consumes them as-is.
    w1_bf = w1.astype(jnp.bfloat16)
    w2_bf = w2.astype(jnp.bfloat16)

    out = feed_forward(x, gamma, beta, w1_bf, b1, w2_bf, b2)
    jax.block_until_ready(out)

    # Reference uses the same (bf16-rounded) weights so the remaining delta is
    # only the bf16 MXU operand rounding of the LayerNorm/GELU activations.
    ref = _reference(x, gamma, beta,
                     w1_bf.astype(jnp.float32), b1,
                     w2_bf.astype(jnp.float32), b2)
    assert out.shape == (B, S, dim)
    assert jnp.allclose(out, ref, atol=2e-2, rtol=2e-2), "mismatch vs reference"

    print("KERNEL_OK")
</pallas_src>

<mosaic_0001>
module attributes {stable_mosaic.version = 11 : i64} {
  func.func @_ffn_kernel(%arg0: i32, %arg1: i32, %arg2: memref<16x32xf32, #tpu.memory_space<vmem>>, %arg3: memref<1x32xf32, #tpu.memory_space<vmem>>, %arg4: memref<1x32xf32, #tpu.memory_space<vmem>>, %arg5: memref<32x64xbf16, #tpu.memory_space<vmem>>, %arg6: memref<1x64xf32, #tpu.memory_space<vmem>>, %arg7: memref<64x32xbf16, #tpu.memory_space<vmem>>, %arg8: memref<1x32xf32, #tpu.memory_space<vmem>>, %arg9: memref<16x32xf32, #tpu.memory_space<vmem>>, %arg10: memref<16x32xbf16, #tpu.memory_space<vmem>>, %arg11: memref<16x32xf32, #tpu.memory_space<vmem>>) attributes {dimension_semantics = [#tpu.dimension_semantics<parallel>, #tpu.dimension_semantics<arbitrary>], iteration_bounds = array<i64: 1, 1>, scalar_prefetch = 0 : i64, scratch_operands = 2 : i64, tpu.core_type = #tpu.core_type<tc>, window_params = [{transform_indices = @transform_0, window_bounds = array<i64: 16, 32>}, {pipeline_mode = #tpu.pipeline_mode<synchronous>, transform_indices = @transform_1, window_bounds = array<i64: 1, 32>}, {pipeline_mode = #tpu.pipeline_mode<synchronous>, transform_indices = @transform_2, window_bounds = array<i64: 1, 32>}, {transform_indices = @transform_3, window_bounds = array<i64: 32, 64>}, {transform_indices = @transform_4, window_bounds = array<i64: 1, 64>}, {transform_indices = @transform_5, window_bounds = array<i64: 64, 32>}, {pipeline_mode = #tpu.pipeline_mode<synchronous>, transform_indices = @transform_6, window_bounds = array<i64: 1, 32>}, {transform_indices = @transform_7, window_bounds = array<i64: 16, 32>}]} {
    %c0_i32 = arith.constant 0 : i32
    %0 = arith.cmpi eq, %arg1, %c0_i32 : i32
    %1 = arith.extui %0 : i1 to i32
    %c0_i32_0 = arith.constant 0 : i32
    %2 = arith.cmpi ne, %1, %c0_i32_0 : i32
    scf.if %2 {
      %c0_18 = arith.constant 0 : index
      %c0_19 = arith.constant 0 : index
      %26 = vector.load %arg2[%c0_18, %c0_19] : memref<16x32xf32, #tpu.memory_space<vmem>>, vector<16x32xf32>
      %cst_20 = arith.constant dense<0.000000e+00> : vector<16xf32>
      %27 = vector.multi_reduction <add>, %26, %cst_20 [1] : vector<16x32xf32> to vector<16xf32>
      %28 = vector.shape_cast %27 : vector<16xf32> to vector<16x1xf32>
      %cst_21 = arith.constant 3.125000e-02 : f32
      %29 = vector.broadcast %cst_21 : f32 to vector<16x1xf32>
      %30 = arith.mulf %28, %29 : vector<16x1xf32>
      %31 = arith.mulf %26, %26 : vector<16x32xf32>
      %cst_22 = arith.constant dense<0.000000e+00> : vector<16xf32>
      %32 = vector.multi_reduction <add>, %31, %cst_22 [1] : vector<16x32xf32> to vector<16xf32>
      %33 = vector.shape_cast %32 : vector<16xf32> to vector<16x1xf32>
      %cst_23 = arith.constant 3.125000e-02 : f32
      %34 = vector.broadcast %cst_23 : f32 to vector<16x1xf32>
      %35 = arith.mulf %33, %34 : vector<16x1xf32>
      %36 = arith.mulf %30, %30 : vector<16x1xf32>
      %37 = arith.subf %35, %36 : vector<16x1xf32>
      %cst_24 = arith.constant 0.000000e+00 : f32
      %38 = vector.broadcast %cst_24 : f32 to vector<16x1xf32>
      %39 = arith.maximumf %37, %38 : vector<16x1xf32>
      %cst_25 = arith.constant 9.99999974E-6 : f32
      %40 = vector.broadcast %cst_25 : f32 to vector<16x1xf32>
      %41 = arith.addf %39, %40 : vector<16x1xf32>
      %42 = math.rsqrt %41 : vector<16x1xf32>
      %43 = vector.broadcast %30 : vector<16x1xf32> to vector<16x32xf32>
      %44 = arith.subf %26, %43 : vector<16x32xf32>
      %45 = vector.broadcast %42 : vector<16x1xf32> to vector<16x32xf32>
      %46 = arith.mulf %44, %45 : vector<16x32xf32>
      %c0_26 = arith.constant 0 : index
      %c0_27 = arith.constant 0 : index
      %47 = vector.load %arg3[%c0_26, %c0_27] : memref<1x32xf32, #tpu.memory_space<vmem>>, vector<1x32xf32>
      %48 = vector.broadcast %47 : vector<1x32xf32> to vector<16x32xf32>
      %49 = arith.mulf %46, %48 : vector<16x32xf32>
      %c0_28 = arith.constant 0 : index
      %c0_29 = arith.constant 0 : index
      %50 = vector.load %arg4[%c0_28, %c0_29] : memref<1x32xf32, #tpu.memory_space<vmem>>, vector<1x32xf32>
      %51 = vector.broadcast %50 : vector<1x32xf32> to vector<16x32xf32>
      %52 = arith.addf %49, %51 : vector<16x32xf32>
      %53 = arith.truncf %52 : vector<16x32xf32> to vector<16x32xbf16>
      %c0_30 = arith.constant 0 : index
      %c0_31 = arith.constant 0 : index
      %54 = vector.load %arg10[%c0_30, %c0_31] : memref<16x32xbf16, #tpu.memory_space<vmem>>, vector<16x32xbf16>
      tpu.vector_store %arg10[%c0_30, %c0_31], %53 {strides = array<i32>} : memref<16x32xbf16, #tpu.memory_space<vmem>>, vector<16x32xbf16>,
      %cst_32 = arith.constant 0.000000e+00 : f32
      %55 = vector.broadcast %cst_32 : f32 to vector<16x32xf32>
      %c0_33 = arith.constant 0 : index
      %c0_34 = arith.constant 0 : index
      %56 = vector.load %arg11[%c0_33, %c0_34] : memref<16x32xf32, #tpu.memory_space<vmem>>, vector<16x32xf32>
      tpu.vector_store %arg11[%c0_33, %c0_34], %55 {strides = array<i32>} : memref<16x32xf32, #tpu.memory_space<vmem>>, vector<16x32xf32>,
    } else {
    }
    %c0 = arith.constant 0 : index
    %c0_1 = arith.constant 0 : index
    %3 = vector.load %arg10[%c0, %c0_1] : memref<16x32xbf16, #tpu.memory_space<vmem>>, vector<16x32xbf16>
    %c0_2 = arith.constant 0 : index
    %c0_3 = arith.constant 0 : index
    %4 = vector.load %arg5[%c0_2, %c0_3] : memref<32x64xbf16, #tpu.memory_space<vmem>>, vector<32x64xbf16>
    %cst = arith.constant dense<0.000000e+00> : vector<16x64xf32>
    %5 = tpu.matmul %3, %4, %cst {dimension_numbers = #tpu.dot_dimension_numbers<[1], [0], [0], [1], [0, 0, 1, 1], [], []>} : vector<16x32xbf16>, vector<32x64xbf16>, vector<16x64xf32> -> vector<16x64xf32>
    %c0_4 = arith.constant 0 : index
    %c0_5 = arith.constant 0 : index
    %6 = vector.load %arg6[%c0_4, %c0_5] : memref<1x64xf32, #tpu.memory_space<vmem>>, vector<1x64xf32>
    %7 = vector.broadcast %6 : vector<1x64xf32> to vector<16x64xf32>
    %8 = arith.addf %5, %7 : vector<16x64xf32>
    %cst_6 = arith.constant 5.000000e-01 : f32
    %9 = vector.broadcast %cst_6 : f32 to vector<16x64xf32>
    %10 = arith.mulf %9, %8 : vector<16x64xf32>
    %cst_7 = arith.constant 0.707106769 : f32
    %11 = vector.broadcast %cst_7 : f32 to vector<16x64xf32>
    %12 = arith.mulf %8, %11 : vector<16x64xf32>
    %13 = math.erf %12 : vector<16x64xf32>
    %cst_8 = arith.constant 1.000000e+00 : f32
    %14 = vector.broadcast %cst_8 : f32 to vector<16x64xf32>
    %15 = arith.addf %14, %13 : vector<16x64xf32>
    %16 = arith.mulf %10, %15 : vector<16x64xf32>
    %c0_9 = arith.constant 0 : index
    %c0_10 = arith.constant 0 : index
    %17 = vector.load %arg11[%c0_9, %c0_10] : memref<16x32xf32, #tpu.memory_space<vmem>>, vector<16x32xf32>
    %18 = arith.truncf %16 : vector<16x64xf32> to vector<16x64xbf16>
    %c0_11 = arith.constant 0 : index
    %c0_12 = arith.constant 0 : index
    %19 = vector.load %arg7[%c0_11, %c0_12] : memref<64x32xbf16, #tpu.memory_space<vmem>>, vector<64x32xbf16>
    %cst_13 = arith.constant dense<0.000000e+00> : vector<16x32xf32>
    %20 = tpu.matmul %18, %19, %cst_13 {dimension_numbers = #tpu.dot_dimension_numbers<[1], [0], [0], [1], [0, 0, 1, 1], [], []>} : vector<16x64xbf16>, vector<64x32xbf16>, vector<16x32xf32> -> vector<16x32xf32>
    %21 = arith.addf %17, %20 : vector<16x32xf32>
    %c0_14 = arith.constant 0 : index
    %c0_15 = arith.constant 0 : index
    %22 = vector.load %arg11[%c0_14, %c0_15] : memref<16x32xf32, #tpu.memory_space<vmem>>, vector<16x32xf32>
    tpu.vector_store %arg11[%c0_14, %c0_15], %21 {strides = array<i32>} : memref<16x32xf32, #tpu.memory_space<vmem>>, vector<16x32xf32>,
    %c0_i32_16 = arith.constant 0 : i32
    %23 = arith.cmpi eq, %arg1, %c0_i32_16 : i32
    %24 = arith.extui %23 : i1 to i32
    %c0_i32_17 = arith.constant 0 : i32
    %25 = arith.cmpi ne, %24, %c0_i32_17 : i32
    scf.if %25 {
      %c0_18 = arith.constant 0 : index
      %c0_19 = arith.constant 0 : index
      %26 = vector.load %arg11[%c0_18, %c0_19] : memref<16x32xf32, #tpu.memory_space<vmem>>, vector<16x32xf32>
      %c0_20 = arith.constant 0 : index
      %c0_21 = arith.constant 0 : index
      %27 = vector.load %arg8[%c0_20, %c0_21] : memref<1x32xf32, #tpu.memory_space<vmem>>, vector<1x32xf32>
      %28 = vector.broadcast %27 : vector<1x32xf32> to vector<16x32xf32>
      %29 = arith.addf %26, %28 : vector<16x32xf32>
      %c0_22 = arith.constant 0 : index
      %c0_23 = arith.constant 0 : index
      %30 = vector.load %arg9[%c0_22, %c0_23] : memref<16x32xf32, #tpu.memory_space<vmem>>, vector<16x32xf32>
      tpu.vector_store %arg9[%c0_22, %c0_23], %29 {strides = array<i32>} : memref<16x32xf32, #tpu.memory_space<vmem>>, vector<16x32xf32>,
    } else {
    }
    return
  }
  func.func @transform_0(%arg0: i32, %arg1: i32) -> (i32, i32) {
    %c0_i32 = arith.constant 0 : i32
    %c0_i32_0 = arith.constant 0 : i32
    return %arg0, %c0_i32 : i32, i32
  }
  func.func @transform_1(%arg0: i32, %arg1: i32) -> (i32, i32) {
    %c0_i32 = arith.constant 0 : i32
    %c0_i32_0 = arith.constant 0 : i32
    %c0_i32_1 = arith.constant 0 : i32
    return %c0_i32, %c0_i32_0 : i32, i32
  }
  func.func @transform_2(%arg0: i32, %arg1: i32) -> (i32, i32) {
    %c0_i32 = arith.constant 0 : i32
    %c0_i32_0 = arith.constant 0 : i32
    %c0_i32_1 = arith.constant 0 : i32
    return %c0_i32, %c0_i32_0 : i32, i32
  }
  func.func @transform_3(%arg0: i32, %arg1: i32) -> (i32, i32) {
    %c0_i32 = arith.constant 0 : i32
    %c0_i32_0 = arith.constant 0 : i32
    return %c0_i32, %arg1 : i32, i32
  }
  func.func @transform_4(%arg0: i32, %arg1: i32) -> (i32, i32) {
    %c0_i32 = arith.constant 0 : i32
    %c0_i32_0 = arith.constant 0 : i32
    return %c0_i32, %arg1 : i32, i32
  }
  func.func @transform_5(%arg0: i32, %arg1: i32) -> (i32, i32) {
    %c0_i32 = arith.constant 0 : i32
    %c0_i32_0 = arith.constant 0 : i32
    return %arg1, %c0_i32 : i32, i32
  }
  func.func @transform_6(%arg0: i32, %arg1: i32) -> (i32, i32) {
    %c0_i32 = arith.constant 0 : i32
    %c0_i32_0 = arith.constant 0 : i32
    %c0_i32_1 = arith.constant 0 : i32
    return %c0_i32, %c0_i32_0 : i32, i32
  }
  func.func @transform_7(%arg0: i32, %arg1: i32) -> (i32, i32) {
    %c0_i32 = arith.constant 0 : i32
    %c0_i32_0 = arith.constant 0 : i32
    return %arg0, %c0_i32 : i32, i32
  }
}

</mosaic_0001>

<llo_original>
// kernel: tpu_custom_call.1
$region0: #{tpu_custom_call.1}
  #allocation0 [shape = 'u32[]', space=smem, size = 0x4, offset = 0x4, fixed_abs, tag = 'smem constant byte address 0x4 - core index']
  #allocation1 [shape = 'u32[144,128]{1,0:T(1,128)}', space=vmem, size = 0x12000, scoped, tag = 'internal scratch']
  #allocation2 [shape = 'bf16[16,32]{1,0:T(16,128)(2,1)}', space=vmem, size = 0x1000, scoped, tag = 'scratch operand']
  #allocation3 [shape = 'f32[16,32]{1,0:T(8,128)}', space=vmem, size = 0x2000, scoped, tag = 'scratch operand']
  %s0 = inlined_call_operand.vmem [shape: f32[16,32], index: 0, kind: input, shape index: {}]
  %s1 = inlined_call_operand.vmem [shape: f32[1,32], index: 1, kind: input, shape index: {}]
  %s2 = inlined_call_operand.vmem [shape: f32[1,32], index: 2, kind: input, shape index: {}]
  %s3 = inlined_call_operand.vmem [shape: bf16[32,64], index: 3, kind: input, shape index: {}]
  %s4 = inlined_call_operand.vmem [shape: f32[1,64], index: 4, kind: input, shape index: {}]
  %s5 = inlined_call_operand.vmem [shape: bf16[64,32], index: 5, kind: input, shape index: {}]
  %s6 = inlined_call_operand.vmem [shape: f32[1,32], index: 6, kind: input, shape index: {}]
  %s7 = inlined_call_operand.hbm [shape: f32[16,32], index: 7, kind: output, shape index: {}]
  %s8 = sld [smem:[#allocation0]]
  $region46: #{tpu_custom_call.1} parent=0
    _
  %s10 = ssub.s32 1, %s8
  %s11 = scalar_select 0, %s10, %s8
  $region1: #{tpu_custom_call.1} parent=0
    #allocation4 [shape = 'u8[8192]{0}', space=vmem, size = 0x2000, scoped, tag = 'output window, operand 0, single buffered']
    #allocation5 [shape = 's32[1]{0}', space=sflag, size = 0x4, scoped, tag = 'scoped memory for tpu_custom_call.1']
    %12 = vsyncpa [#allocation5], 0
    // Predicated region
    $region2: #{tpu_custom_call.1} parent=1 // pred_check
      _
    $region3: #{tpu_custom_call.1} parent=1 // pred_check_branch
      %14 = sbr.rel (0) target = $region5
    $region4: #{tpu_custom_call.1} parent=1 // pred_region
      _
    $region5: #{tpu_custom_call.1} parent=1 // pred_fallthru
      _
    // Predicated region
    $region6: #{tpu_custom_call.1} parent=1 // pred_check
      _
    $region7: #{tpu_custom_call.1} parent=1 // pred_check_branch
      %16 = sbr.rel (0) target = $region9
    $region8: #{tpu_custom_call.1} parent=1 // pred_region
      _
    $region9: #{tpu_custom_call.1} parent=1 // pred_fallthru
      _
    // Predicated region
    $region10: #{tpu_custom_call.1} parent=1 // pred_check
      _
    $region11: #{tpu_custom_call.1} parent=1 // pred_check_branch
      %18 = sbr.rel (0) target = $region13
    $region12: #{tpu_custom_call.1} parent=1 // pred_region
      _
    $region13: #{tpu_custom_call.1} parent=1 // pred_fallthru
      _
    // Predicated region
    $region14: #{tpu_custom_call.1} parent=1 // pred_check
      _
    $region15: #{tpu_custom_call.1} parent=1 // pred_check_branch
      %20 = sbr.rel (0) target = $region17
    $region16: #{tpu_custom_call.1} parent=1 // pred_region
      _
    $region17: #{tpu_custom_call.1} parent=1 // pred_fallthru
      _
    // Predicated region
    $region18: #{tpu_custom_call.1} parent=1 // pred_check
      _
    $region19: #{tpu_custom_call.1} parent=1 // pred_check_branch
      %22 = sbr.rel (0) target = $region21
    $region20: #{tpu_custom_call.1} parent=1 // pred_region
      _
    $region21: #{tpu_custom_call.1} parent=1 // pred_fallthru
      _
    // Predicated region
    $region22: #{tpu_custom_call.1} parent=1 // pred_check
      _
    $region23: #{tpu_custom_call.1} parent=1 // pred_check_branch
      %24 = sbr.rel (0) target = $region25
    $region24: #{tpu_custom_call.1} parent=1 // pred_region
      _
    $region25: #{tpu_custom_call.1} parent=1 // pred_fallthru
      _
    // Predicated region
    $region26: #{tpu_custom_call.1} parent=1 // pred_check
      _
    $region27: #{tpu_custom_call.1} parent=1 // pred_check_branch
      %26 = sbr.rel (0) target = $region29
    $region28: #{tpu_custom_call.1} parent=1 // pred_region
      _
    $region29: #{tpu_custom_call.1} parent=1 // pred_fallthru
      _
    %p28 = scmp.eq.s32.totalorder 0, 0
    // Predicated region
    $region30: #{tpu_custom_call.1} parent=1 // pred_check
      %p29 = pneg %p28
    $region31: #{tpu_custom_call.1} parent=1 // pred_check_branch
      %31 = sbr.rel (%p29) target = $region33
    $region32: #{tpu_custom_call.1} parent=1 // pred_region
      %v32 = vld [vmem:[%s0] sm:$0xff]
      %v33 = vld [vmem:[%s0 + $0x8] sm:$0xff]
      %vm34 = vcmask 261120
      %v35 = vsel %vm34, %v32, 0.0
      %36 = vadd.xlane.f32.xlu0 %v35
      %v37 = vpop.xlane.xlu0 %36
      %v38 = vsel %vm34, %v33, 0.0
      %39 = vadd.xlane.f32.xlu0 %v38
      %v40 = vpop.xlane.xlu0 %39
      %v41 = vmul.f32 %v37, 0.03125
      %v42 = vmul.f32 %v40, 0.03125
      %v43 = vmul.f32 %v32, %v32
      %v44 = vmul.f32 %v33, %v33
      %v45 = vsel %vm34, %v43, 0.0
      %46 = vadd.xlane.f32.xlu0 %v45
      %v47 = vpop.xlane.xlu0 %46
      %v48 = vsel %vm34, %v44, 0.0
      %49 = vadd.xlane.f32.xlu0 %v48
      %v50 = vpop.xlane.xlu0 %49
      %v51 = vmul.f32 %v47, 0.03125
      %v52 = vmul.f32 %v50, 0.03125
      %v53 = vmul.f32 %v41, %v41
      %v54 = vmul.f32 %v42, %v42
      %v55 = vsub.f32 %v51, %v53
      %v56 = vsub.f32 %v52, %v54
      %v57 = vmax.f32 %v55, 0.0
      %v58 = vmax.f32 %v56, 0.0
      %v59 = vadd.f32 %v57, 1e-05
      %v60 = vadd.f32 %v58, 1e-05
      %v61 = vrsqrt.pop %v59
      %v62 = vrsqrt.pop %v60
      %v63 = vsub.f32 %v32, %v41
      %v64 = vsub.f32 %v33, %v42
      %v65 = vmul.f32 %v63, %v61
      %v66 = vmul.f32 %v64, %v62
      %v67 = vld [vmem:[%s1] sm:$0x1]
      %v69 = vlaneseq
      %v70 = vshrl.u32 %v69, 7
      %v71 = vsub.s32 0, %v70
      %v72 = vrot.slane %v67, %v71
      %v74 = vmul.f32 %v65, %v72
      %v75 = vmul.f32 %v66, %v72
      %v76 = vld [vmem:[%s2] sm:$0x1]
      %v78 = vlaneseq
      %v79 = vshrl.u32 %v78, 7
      %v80 = vsub.s32 0, %v79
      %v81 = vrot.slane %v76, %v80
      %v83 = vadd.f32 %v74, %v81
      %v84 = vadd.f32 %v75, %v81
      %v85 = vpack.c.bf16 %v84, %v83
      %86 = vst.msk [vmem:[#allocation2] sm:$0xff] %vm34, %v85
      %87 = vst.msk [vmem:[#allocation3] sm:$0xff] %vm34, 0.0
      %88 = vst.msk [vmem:[#allocation3 + $0x8] sm:$0xff] %vm34, 0.0
    $region33: #{tpu_custom_call.1} parent=1 // pred_fallthru
      _
    %v89 = vld [vmem:[#allocation2] sm:$0xff]
    %v90 = vld [vmem:[%s3] sm:$0xf]
    %v91 = vld [vmem:[%s3 + $0x4] sm:$0xf]
    %v92 = vld [vmem:[%s3 + $0x8] sm:$0xf]
    %v93 = vld [vmem:[%s3 + $0xc] sm:$0xf]
    %v94 = vld [vmem:[%s4] sm:$0x1]
    %v96 = vlaneseq
    %v97 = vshrl.u32 %v96, 7
    %v98 = vsub.s32 0, %v97
    %v99 = vrot.slane %v94, %v98
    %v105 = vunpack.c.l.b16 %v90
    %v106 = vunpack.c.l.b16 %v91
    %v107 = vunpack.c.l.b16 %v92
    %v108 = vunpack.c.l.b16 %v93
    %v109 = vpack.c.b16 %v106, %v105
    %v110 = vpack.c.b16 %v108, %v107
    %vm113 = vcmask 261120
    %v115 = vsel %vm113, %v89, 0
    %117 = vmatprep.subr.bf16.mxu0 0
    %118 = vmatpush1.bf16.msra.mxu0 %v109
    %119 = vmatprep.subr.bf16.mxu0 0
    %120 = vmatpush1.bf16.msra.mxu0 %v110
    %121 = vmatprep.subr.bf16.mxu0 0
    %122 = vmatpush1.bf16.msra.mxu0 0
    %123 = vmatprep.subr.bf16.mxu0 0
    %124 = vmatpush1.bf16.msra.mxu0 0
    %125 = vmatprep.subr.bf16.mxu0 0
    %126 = vmatpush1.bf16.msra.mxu0 0
    %127 = vmatprep.subr.bf16.mxu0 0
    %128 = vmatpush1.bf16.msra.mxu0 0
    %129 = vmatprep.subr.bf16.mxu0 0
    %130 = vmatpush1.bf16.msra.mxu0 0
    %131 = vmatprep.subr.bf16.mxu0 0
    %132 = vmatpush1.bf16.msra.mxu0 0
    %133 = vmatprep.subr.bf16.mxu0 0
    %134 = vmatpush1.bf16.msra.mxu0 0
    %135 = vmatprep.subr.bf16.mxu0 0
    %136 = vmatpush1.bf16.msra.mxu0 0
    %137 = vmatprep.subr.bf16.mxu0 0
    %138 = vmatpush1.bf16.msra.mxu0 0
    %139 = vmatprep.subr.bf16.mxu0 0
    %140 = vmatpush1.bf16.msra.mxu0 0
    %141 = vmatprep.subr.bf16.mxu0 0
    %142 = vmatpush1.bf16.msra.mxu0 0
    %143 = vmatprep.subr.bf16.mxu0 0
    %144 = vmatpush1.bf16.msra.mxu0 0
    %145 = vmatprep.subr.bf16.mxu0 0
    %146 = vmatpush1.bf16.msra.mxu0 0
    %147 = vmatprep.subr.bf16.mxu0 0
    %148 = vmatpush1.bf16.msra.mxu0 0
    %149 = vmatprep.mubr.bf16.mxu0 0
    %150 = vmatmul.mubr.bf16.gmra.mrb[0].mxu0 %v115
    %v151 = vpop.f32.mrb[0].mxu0
    %v152 = vadd.f32 %v99, %v151
    %v153 = vpop.f32.mrb[0].mxu0
    %v154 = vpop.f32.mrb[0].mxu0
    %v155 = vadd.f32 %v99, %v154
    %v156 = vpop.f32.mrb[0].mxu0
    %157 = vdwg.mxu0
    %v158 = vmul.f32 %v152, 0.5
    %v159 = vmul.f32 %v155, 0.5
    %v160 = vmul.f32 %v152, 0.70710677
    %v161 = vmul.f32 %v155, 0.70710677
    %v162 = verf.f32.pop %v160
    %v163 = verf.f32.pop %v161
    %v164 = vadd.f32 %v162, 1.0
    %v165 = vadd.f32 %v163, 1.0
    %v166 = vmul.f32 %v158, %v164
    %v167 = vmul.f32 %v159, %v165
    %v168 = vld [vmem:[#allocation3] sm:$0xff]
    %v169 = vld [vmem:[#allocation3 + $0x8] sm:$0xff]
    %v170 = vpack.c.bf16 %v167, %v166
    %v171 = vld [vmem:[%s5] sm:$0xf]
    %v172 = vld [vmem:[%s5 + $0x4] sm:$0xf]
    %v173 = vld [vmem:[%s5 + $0x8] sm:$0xf]
    %v174 = vld [vmem:[%s5 + $0xc] sm:$0xf]
    %v175 = vld [vmem:[%s5 + $0x10] sm:$0xf]
    %v176 = vld [vmem:[%s5 + $0x14] sm:$0xf]
    %v177 = vld [vmem:[%s5 + $0x18] sm:$0xf]
    %v178 = vld [vmem:[%s5 + $0x1c] sm:$0xf]
    %v187 = vunpack.c.l.b16 %v171
    %v188 = vunpack.c.l.b16 %v172
    %v189 = vunpack.c.l.b16 %v173
    %v190 = vunpack.c.l.b16 %v174
    %v191 = vunpack.c.l.b16 %v175
    %v192 = vunpack.c.l.b16 %v176
    %v193 = vunpack.c.l.b16 %v177
    %v194 = vunpack.c.l.b16 %v178
    %v195 = vpack.c.b16 %v188, %v187
    %v196 = vpack.c.b16 %v190, %v189
    %v197 = vpack.c.b16 %v192, %v191
    %v198 = vpack.c.b16 %v194, %v193
    %vm203 = vcmask 523264
    %v205 = vsel %vm203, %v170, 0
    %207 = vmatprep.subr.bf16.mxu0 0
    %208 = vmatpush1.bf16.msra.mxu0 %v195
    %209 = vmatprep.subr.bf16.mxu0 0
    %210 = vmatpush1.bf16.msra.mxu0 %v196
    %211 = vmatprep.subr.bf16.mxu0 0
    %212 = vmatpush1.bf16.msra.mxu0 %v197
    %213 = vmatprep.subr.bf16.mxu0 0
    %214 = vmatpush1.bf16.msra.mxu0 %v198
    %215 = vmatprep.subr.bf16.mxu0 0
    %216 = vmatpush1.bf16.msra.mxu0 0
    %217 = vmatprep.subr.bf16.mxu0 0
    %218 = vmatpush1.bf16.msra.mxu0 0
    %219 = vmatprep.subr.bf16.mxu0 0
    %220 = vmatpush1.bf16.msra.mxu0 0
    %221 = vmatprep.subr.bf16.mxu0 0
    %222 = vmatpush1.bf16.msra.mxu0 0
    %223 = vmatprep.subr.bf16.mxu0 0
    %224 = vmatpush1.bf16.msra.mxu0 0
    %225 = vmatprep.subr.bf16.mxu0 0
    %226 = vmatpush1.bf16.msra.mxu0 0
    %227 = vmatprep.subr.bf16.mxu0 0
    %228 = vmatpush1.bf16.msra.mxu0 0
    %229 = vmatprep.subr.bf16.mxu0 0
    %230 = vmatpush1.bf16.msra.mxu0 0
    %231 = vmatprep.subr.bf16.mxu0 0
    %232 = vmatpush1.bf16.msra.mxu0 0
    %233 = vmatprep.subr.bf16.mxu0 0
    %234 = vmatpush1.bf16.msra.mxu0 0
    %235 = vmatprep.subr.bf16.mxu0 0
    %236 = vmatpush1.bf16.msra.mxu0 0
    %237 = vmatprep.subr.bf16.mxu0 0
    %238 = vmatpush1.bf16.msra.mxu0 0
    %239 = vmatprep.mubr.bf16.mxu0 0
    %240 = vmatmul.mubr.bf16.gmra.mrb[0].mxu0 %v205
    %v241 = vpop.f32.mrb[0].mxu0
    %v242 = vadd.f32 0.0, %v241
    %v243 = vpop.f32.mrb[0].mxu0
    %v244 = vpop.f32.mrb[0].mxu0
    %v245 = vadd.f32 0.0, %v244
    %v246 = vpop.f32.mrb[0].mxu0
    %247 = vdwg.mxu0
    %v248 = vadd.f32 %v168, %v242
    %v249 = vadd.f32 %v169, %v245
    %250 = vst.msk [vmem:[#allocation3] sm:$0xff] %vm113, %v248
    %251 = vst.msk [vmem:[#allocation3 + $0x8] sm:$0xff] %vm113, %v249
    // Predicated region
    $region34: #{tpu_custom_call.1} parent=1 // pred_check
      %p252 = pneg %p28
    $region35: #{tpu_custom_call.1} parent=1 // pred_check_branch
      %254 = sbr.rel (%p252) target = $region37
    $region36: #{tpu_custom_call.1} parent=1 // pred_region
      %v255 = vld [vmem:[#allocation3] sm:$0xff]
      %v256 = vld [vmem:[#allocation3 + $0x8] sm:$0xff]
      %v257 = vld [vmem:[%s6] sm:$0x1]
      %v259 = vlaneseq
      %v260 = vshrl.u32 %v259, 7
      %v261 = vsub.s32 0, %v260
      %v262 = vrot.slane %v257, %v261
      %v264 = vadd.f32 %v255, %v262
      %v265 = vadd.f32 %v256, %v262
      %266 = vst.msk [vmem:[#allocation4] sm:$0xff] %vm113, %v264
      %267 = vst.msk [vmem:[#allocation4 + $0x8] sm:$0xff] %vm113, %v265
    $region37: #{tpu_custom_call.1} parent=1 // pred_fallthru
      _
    // Predicated region
    $region38: #{tpu_custom_call.1} parent=1 // pred_check
      _
    $region39: #{tpu_custom_call.1} parent=1 // pred_check_branch
      %269 = sbr.rel (0) target = $region41
    $region40: #{tpu_custom_call.1} parent=1 // pred_region
      %s271 = ssub.s32 256, 256
      %272 = vsyncadd [#allocation5], %s271
      %s273 = sshll.u32 [#allocation4], 4
      %s274 = int_to_ptr.vmem [resolvable:$true] %s273
      %279 = dma.vmem_to_hbm [thread:$0]  %s274, 256, %s7, [#allocation5], 128, 128, 8
    $region41: #{tpu_custom_call.1} parent=1 // pred_fallthru
      _
    // Predicated region
    $region42: #{tpu_custom_call.1} parent=1 // pred_check
      _
    $region43: #{tpu_custom_call.1} parent=1 // pred_check_branch
      %281 = sbr.rel (0) target = $region45
    $region44: #{tpu_custom_call.1} parent=1 // pred_region
      %282 = dma.done [#allocation5], 256
    $region45: #{tpu_custom_call.1} parent=1 // pred_fallthru
      _
    %283 = vsyncpa [#allocation5], 1

</llo_original>
